<compile_context>
chip_gen: v5e
topology: v5e:2x2
jax: 0.10.0
libtpu: 0.0.40
codegen_flags: <defaults>
</compile_context>

<pallas_src>
import functools

import jax
import jax.numpy as jnp
from jax.experimental import pallas as pl
from jax.experimental.pallas import tpu as pltpu


def _loss_kernel(xh_ref, rh_ref, b0_ref, b1_ref, out_ref, *,
                 batch, n_frames, fpad, spec_scale, wave_scale):
    """xh/rh: ((n_frames+1)*batch, hop) half-frames, t-major (row = t*B + b).
    b0/b1: (hop, 2*fpad) bf16 window-folded DFT basis halves."""
    B = batch
    T = n_frames

    xh = xh_ref[...].astype(jnp.float32)          # (R, hop), R = (T+1)*B
    rh = rh_ref[...].astype(jnp.float32)
    R = xh.shape[0]

    # Row-validity masks (t-major layout => simple compares, no modulo).
    ridx = jax.lax.broadcasted_iota(jnp.int32, (R, 1), 0)
    frame_valid = ridx < T * B                        # rows with t < n_frames
    wave_valid = jnp.logical_and(ridx >= B, ridx < T * B)   # 1 <= t <= T-1

    # ---- waveform MSE: interior half-frames tile the unpadded signal exactly.
    dw = jnp.where(wave_valid, rh - xh, 0.0)
    mse_sum = jnp.sum(dw * dw)

    # ---- power spectrogram via the 50%-overlap two-matmul factorization.
    def spec_power(h32):
        hb = h32.astype(jnp.bfloat16)                 # bf16 MXU operands
        # half-frame t+1 aligned with frame-row t (wrapped tail rows are masked).
        gb = jnp.concatenate([hb[B:], hb[:B]], axis=0)
        s = (jnp.dot(hb, b0_ref[...], preferred_element_type=jnp.float32)
             + jnp.dot(gb, b1_ref[...], preferred_element_type=jnp.float32))
        re = s[:, :fpad]                              # tile-aligned re/im split
        im = s[:, fpad:]
        return re * re + im * im                      # power = 2.0

    d = jnp.where(frame_valid, spec_power(xh) - spec_power(rh), 0.0)
    ad = jnp.abs(d)
    sl1_sum = jnp.sum(jnp.where(ad < 1.0, 0.5 * d * d, ad - 0.5))   # beta = 1.0

    out_ref[0, 0] = (jnp.float32(spec_scale) * sl1_sum
                     + jnp.float32(wave_scale) * mse_sum)


@functools.lru_cache(maxsize=None)
def _dft_basis(n_fft):
    """Cached per n_fft: window-folded one-sided DFT basis, split at hop, bf16."""
    hop = n_fft // 2
    n_freq = n_fft // 2 + 1
    fpad = ((n_freq + 127) // 128) * 128              # lane-dense half width
    n = jnp.arange(n_fft, dtype=jnp.float32)
    k = jnp.arange(n_freq, dtype=jnp.float32)
    win = 0.5 - 0.5 * jnp.cos(2.0 * jnp.pi * n / n_fft)       # periodic Hann
    ang = (2.0 * jnp.pi / n_fft) * n[:, None] * k[None, :]
    basis = jnp.zeros((n_fft, 2 * fpad), jnp.float32)
    basis = basis.at[:, :n_freq].set(win[:, None] * jnp.cos(ang))
    basis = basis.at[:, fpad:fpad + n_freq].set(-win[:, None] * jnp.sin(ang))
    basis = basis.astype(jnp.bfloat16)
    return basis[:hop], basis[hop:], fpad, n_freq


def loss_function(x, recons, *, n_fft):
    """x, recons: (B, L) float32 waveforms. Returns scalar f32 loss."""
    assert x.shape == recons.shape and x.ndim == 2
    B, L = x.shape
    hop = n_fft // 2
    p = hop
    assert p <= L - 1, "reflect padding requires n_fft//2 <= L-1"
    # TODO(synk): support L % hop != 0 (trailing samples past the last full
    # frame are unused by the STFT grid; trim/pad the half-frame view).
    assert L % hop == 0
    T = 1 + L // hop                                   # n_frames

    b0, b1, fpad, n_freq = _dft_basis(n_fft)

    def halves(sig):
        # center=True reflect pad, then a pure-view reshape to half-frames,
        # t-major so frame-validity in the kernel is a single iota compare.
        sp = jnp.pad(sig, ((0, 0), (p, p)), mode="reflect")        # (B, L+n_fft)
        return (sp.reshape(B, T + 1, hop)
                  .transpose(1, 0, 2)
                  .reshape((T + 1) * B, hop))

    xh = halves(x)
    rh = halves(recons)

    spec_scale = 1e-5 / float(B * T * n_freq)          # SmoothL1 'mean' * 1e-5
    wave_scale = 1.0 / float(B * L)                    # MSE 'mean'

    kernel = functools.partial(
        _loss_kernel, batch=B, n_frames=T, fpad=fpad,
        spec_scale=spec_scale, wave_scale=wave_scale)

    out = pl.pallas_call(
        kernel,
        out_shape=jax.ShapeDtypeStruct((1, 1), jnp.float32),
        in_specs=[pl.BlockSpec(memory_space=pltpu.MemorySpace.VMEM)] * 4,
        out_specs=pl.BlockSpec(memory_space=pltpu.MemorySpace.SMEM),
    )(xh, rh, b0, b1)
    return out[0, 0]


def _reference(x, recons, *, n_fft):
    """Pure-JAX reference with exact torchaudio/PyTorch forward semantics."""
    B, L = x.shape
    hop = n_fft // 2
    p = n_fft // 2
    n_frames = 1 + L // hop
    win = 0.5 - 0.5 * jnp.cos(2.0 * jnp.pi * jnp.arange(n_fft) / n_fft)

    def spec(sig):
        sp = jnp.pad(sig, ((0, 0), (p, p)), mode="reflect")
        frames = jnp.stack(
            [sp[:, t * hop:t * hop + n_fft] for t in range(n_frames)], axis=1)
        F = jnp.fft.rfft(frames * win, axis=-1)
        return jnp.real(F) ** 2 + jnp.imag(F) ** 2      # power = 2.0

    sx, sr = spec(x), spec(recons)
    d = sx - sr
    ad = jnp.abs(d)
    sl1 = jnp.mean(jnp.where(ad < 1.0, 0.5 * d * d, ad - 0.5))  # SmoothL1Loss
    mse = jnp.mean((recons - x) ** 2)                            # MSELoss
    return 1e-5 * sl1 + mse


if __name__ == "__main__":
    # Toy sizes: batch=2, waveform length=256.  The module's default srate
    # (= n_fft) of 32000 is shrunk to 64 so the toy problem is one VMEM block.
    B, L = 2, 256
    N_FFT = 64

    key = jax.random.PRNGKey(0)
    kx, kr = jax.random.split(key)
    x = jax.random.normal(kx, (B, L), dtype=jnp.float32)
    recons = jax.random.normal(kr, (B, L), dtype=jnp.float32)

    out = loss_function(x, recons, n_fft=N_FFT)
    out = jax.block_until_ready(out)

    ref = _reference(x, recons, n_fft=N_FFT)
    assert out.shape == ref.shape == (), (out.shape, ref.shape)
    # bf16 MXU operands: the 1e-5-scaled spectral term bounds that error far
    # below 5e-5 on a loss of ~2; MSE stays full f32.
    assert jnp.allclose(out, ref, rtol=1e-5, atol=5e-5), (float(out), float(ref))

    print("KERNEL_OK")
</pallas_src>

<mosaic_0001>
module attributes {stable_mosaic.version = 11 : i64} {
  func.func @_loss_kernel(%arg0: memref<20x32xf32, #tpu.memory_space<vmem>>, %arg1: memref<20x32xf32, #tpu.memory_space<vmem>>, %arg2: memref<32x256xbf16, #tpu.memory_space<vmem>>, %arg3: memref<32x256xbf16, #tpu.memory_space<vmem>>, %arg4: memref<1x1xf32, #tpu.memory_space<smem>>) attributes {dimension_semantics = [], scalar_prefetch = 0 : i64, scratch_operands = 0 : i64, tpu.core_type = #tpu.core_type<tc>} {
    %c0 = arith.constant 0 : index
    %c0_0 = arith.constant 0 : index
    %0 = vector.load %arg0[%c0, %c0_0] : memref<20x32xf32, #tpu.memory_space<vmem>>, vector<20x32xf32>
    %c0_1 = arith.constant 0 : index
    %c0_2 = arith.constant 0 : index
    %1 = vector.load %arg1[%c0_1, %c0_2] : memref<20x32xf32, #tpu.memory_space<vmem>>, vector<20x32xf32>
    %2 = tpu.iota {dimensions = array<i32: 0>} : vector<20x1xi32>
    %c18_i32 = arith.constant 18 : i32
    %3 = vector.broadcast %c18_i32 : i32 to vector<20x1xi32>
    %4 = arith.cmpi slt, %2, %3 : vector<20x1xi32>
    %c2_i32 = arith.constant 2 : i32
    %5 = vector.broadcast %c2_i32 : i32 to vector<20x1xi32>
    %6 = arith.cmpi sge, %2, %5 : vector<20x1xi32>
    %c18_i32_3 = arith.constant 18 : i32
    %7 = vector.broadcast %c18_i32_3 : i32 to vector<20x1xi32>
    %8 = arith.cmpi slt, %2, %7 : vector<20x1xi32>
    %9 = arith.andi %6, %8 : vector<20x1xi1>
    %10 = arith.subf %1, %0 : vector<20x32xf32>
    %cst = arith.constant 0.000000e+00 : f32
    %11 = vector.shape_cast %9 : vector<20x1xi1> to vector<20x1xi1>
    %12 = vector.broadcast %11 : vector<20x1xi1> to vector<20x32xi1>
    %13 = vector.broadcast %cst : f32 to vector<20x32xf32>
    %14 = arith.select %12, %10, %13 : vector<20x32xi1>, vector<20x32xf32>
    %15 = arith.mulf %14, %14 : vector<20x32xf32>
    %16 = vector.shape_cast %15 : vector<20x32xf32> to vector<1x20x32xf32>
    %cst_4 = arith.constant dense<0.000000e+00> : vector<1xf32>
    %17 = vector.multi_reduction <add>, %16, %cst_4 [1, 2] : vector<1x20x32xf32> to vector<1xf32>
    %18 = vector.shape_cast %17 : vector<1xf32> to vector<1x1x1xf32>
    %19 = vector.extract %18[0, 0, 0] : f32 from vector<1x1x1xf32>
    %20 = arith.truncf %0 : vector<20x32xf32> to vector<20x32xbf16>
    %21 = vector.extract_strided_slice %20 {offsets = [2, 0], sizes = [18, 32], strides = [1, 1]} : vector<20x32xbf16> to vector<18x32xbf16>
    %22 = vector.extract_strided_slice %20 {offsets = [0, 0], sizes = [2, 32], strides = [1, 1]} : vector<20x32xbf16> to vector<2x32xbf16>
    %23 = tpu.concatenate %21, %22 in 0 : vector<18x32xbf16>, vector<2x32xbf16> -> vector<20x32xbf16>
    %c0_5 = arith.constant 0 : index
    %c0_6 = arith.constant 0 : index
    %24 = vector.load %arg2[%c0_5, %c0_6] : memref<32x256xbf16, #tpu.memory_space<vmem>>, vector<32x256xbf16>
    %cst_7 = arith.constant dense<0.000000e+00> : vector<20x256xf32>
    %25 = tpu.matmul %20, %24, %cst_7 {dimension_numbers = #tpu.dot_dimension_numbers<[1], [0], [0], [1], [0, 0, 1, 1], [], []>} : vector<20x32xbf16>, vector<32x256xbf16>, vector<20x256xf32> -> vector<20x256xf32>
    %c0_8 = arith.constant 0 : index
    %c0_9 = arith.constant 0 : index
    %26 = vector.load %arg3[%c0_8, %c0_9] : memref<32x256xbf16, #tpu.memory_space<vmem>>, vector<32x256xbf16>
    %cst_10 = arith.constant dense<0.000000e+00> : vector<20x256xf32>
    %27 = tpu.matmul %23, %26, %cst_10 {dimension_numbers = #tpu.dot_dimension_numbers<[1], [0], [0], [1], [0, 0, 1, 1], [], []>} : vector<20x32xbf16>, vector<32x256xbf16>, vector<20x256xf32> -> vector<20x256xf32>
    %28 = arith.addf %25, %27 : vector<20x256xf32>
    %29 = vector.extract_strided_slice %28 {offsets = [0, 0], sizes = [20, 128], strides = [1, 1]} : vector<20x256xf32> to vector<20x128xf32>
    %30 = vector.extract_strided_slice %28 {offsets = [0, 128], sizes = [20, 128], strides = [1, 1]} : vector<20x256xf32> to vector<20x128xf32>
    %31 = arith.mulf %29, %29 : vector<20x128xf32>
    %32 = arith.mulf %30, %30 : vector<20x128xf32>
    %33 = arith.addf %31, %32 : vector<20x128xf32>
    %34 = arith.truncf %1 : vector<20x32xf32> to vector<20x32xbf16>
    %35 = vector.extract_strided_slice %34 {offsets = [2, 0], sizes = [18, 32], strides = [1, 1]} : vector<20x32xbf16> to vector<18x32xbf16>
    %36 = vector.extract_strided_slice %34 {offsets = [0, 0], sizes = [2, 32], strides = [1, 1]} : vector<20x32xbf16> to vector<2x32xbf16>
    %37 = tpu.concatenate %35, %36 in 0 : vector<18x32xbf16>, vector<2x32xbf16> -> vector<20x32xbf16>
    %c0_11 = arith.constant 0 : index
    %c0_12 = arith.constant 0 : index
    %38 = vector.load %arg2[%c0_11, %c0_12] : memref<32x256xbf16, #tpu.memory_space<vmem>>, vector<32x256xbf16>
    %cst_13 = arith.constant dense<0.000000e+00> : vector<20x256xf32>
    %39 = tpu.matmul %34, %38, %cst_13 {dimension_numbers = #tpu.dot_dimension_numbers<[1], [0], [0], [1], [0, 0, 1, 1], [], []>} : vector<20x32xbf16>, vector<32x256xbf16>, vector<20x256xf32> -> vector<20x256xf32>
    %c0_14 = arith.constant 0 : index
    %c0_15 = arith.constant 0 : index
    %40 = vector.load %arg3[%c0_14, %c0_15] : memref<32x256xbf16, #tpu.memory_space<vmem>>, vector<32x256xbf16>
    %cst_16 = arith.constant dense<0.000000e+00> : vector<20x256xf32>
    %41 = tpu.matmul %37, %40, %cst_16 {dimension_numbers = #tpu.dot_dimension_numbers<[1], [0], [0], [1], [0, 0, 1, 1], [], []>} : vector<20x32xbf16>, vector<32x256xbf16>, vector<20x256xf32> -> vector<20x256xf32>
    %42 = arith.addf %39, %41 : vector<20x256xf32>
    %43 = vector.extract_strided_slice %42 {offsets = [0, 0], sizes = [20, 128], strides = [1, 1]} : vector<20x256xf32> to vector<20x128xf32>
    %44 = vector.extract_strided_slice %42 {offsets = [0, 128], sizes = [20, 128], strides = [1, 1]} : vector<20x256xf32> to vector<20x128xf32>
    %45 = arith.mulf %43, %43 : vector<20x128xf32>
    %46 = arith.mulf %44, %44 : vector<20x128xf32>
    %47 = arith.addf %45, %46 : vector<20x128xf32>
    %48 = arith.subf %33, %47 : vector<20x128xf32>
    %cst_17 = arith.constant 0.000000e+00 : f32
    %49 = vector.shape_cast %4 : vector<20x1xi1> to vector<20x1xi1>
    %50 = vector.broadcast %49 : vector<20x1xi1> to vector<20x128xi1>
    %51 = vector.broadcast %cst_17 : f32 to vector<20x128xf32>
    %52 = arith.select %50, %48, %51 : vector<20x128xi1>, vector<20x128xf32>
    %53 = math.absf %52 : vector<20x128xf32>
    %cst_18 = arith.constant 1.000000e+00 : f32
    %54 = vector.broadcast %cst_18 : f32 to vector<20x128xf32>
    %55 = arith.cmpf olt, %53, %54 : vector<20x128xf32>
    %cst_19 = arith.constant 5.000000e-01 : f32
    %56 = vector.broadcast %cst_19 : f32 to vector<20x128xf32>
    %57 = arith.mulf %56, %52 : vector<20x128xf32>
    %58 = arith.mulf %57, %52 : vector<20x128xf32>
    %cst_20 = arith.constant 5.000000e-01 : f32
    %59 = vector.broadcast %cst_20 : f32 to vector<20x128xf32>
    %60 = arith.subf %53, %59 : vector<20x128xf32>
    %61 = arith.select %55, %58, %60 : vector<20x128xi1>, vector<20x128xf32>
    %62 = vector.shape_cast %61 : vector<20x128xf32> to vector<1x20x128xf32>
    %cst_21 = arith.constant dense<0.000000e+00> : vector<1xf32>
    %63 = vector.multi_reduction <add>, %62, %cst_21 [1, 2] : vector<1x20x128xf32> to vector<1xf32>
    %64 = vector.shape_cast %63 : vector<1xf32> to vector<1x1x1xf32>
    %65 = vector.extract %64[0, 0, 0] : f32 from vector<1x1x1xf32>
    %cst_22 = arith.constant 1.68350169E-8 : f32
    %66 = arith.mulf %cst_22, %65 : f32
    %cst_23 = arith.constant 0.001953125 : f32
    %67 = arith.mulf %cst_23, %19 : f32
    %68 = arith.addf %66, %67 : f32
    %c0_24 = arith.constant 0 : index
    %c0_25 = arith.constant 0 : index
    %69 = memref.load %arg4[%c0_24, %c0_25] : memref<1x1xf32, #tpu.memory_space<smem>>
    memref.store %68, %arg4[%c0_24, %c0_25] : memref<1x1xf32, #tpu.memory_space<smem>>
    return
  }
}

</mosaic_0001>

<llo_original>
// kernel: tpu_custom_call.1
$region0: #{tpu_custom_call.1}
  #allocation0 [shape = 'u32[]', space=smem, size = 0x4, offset = 0x4, fixed_abs, tag = 'smem constant byte address 0x4 - core index']
  #allocation1 [shape = 'u32[72,128]{1,0:T(1,128)}', space=vmem, size = 0x9000, scoped, tag = 'internal scratch']
  %s0 = inlined_call_operand.hbm [shape: f32[20,32], index: 0, kind: input, shape index: {}]
  %s1 = inlined_call_operand.hbm [shape: f32[20,32], index: 1, kind: input, shape index: {}]
  %s2 = inlined_call_operand.hbm [shape: bf16[32,256], index: 2, kind: input, shape index: {}]
  %s3 = inlined_call_operand.hbm [shape: bf16[32,256], index: 3, kind: input, shape index: {}]
  %s4 = inlined_call_operand.hbm [shape: f32[1,1], index: 4, kind: output, shape index: {}]
  %s5 = sld [smem:[#allocation0]]
  $region42: #{tpu_custom_call.1} parent=0
    _
  %s7 = ssub.s32 1, %s5
  %s8 = scalar_select 0, %s7, %s5
  $region1: #{tpu_custom_call.1} parent=0
    #allocation2 [shape = 'u8[12288]{0}', space=vmem, size = 0x3000, scoped, tag = 'input window, operand 0, single buffered']
    #allocation3 [shape = 's32[1]{0}', space=sflag, size = 0x4, scoped, tag = 'scoped memory for tpu_custom_call.1']
    #allocation4 [shape = 's32[1]{0}', space=sflag, size = 0x4, scoped, tag = 'scoped memory for tpu_custom_call.1']
    #allocation5 [shape = 'u8[12288]{0}', space=vmem, size = 0x3000, scoped, tag = 'input window, operand 1, single buffered']
    #allocation6 [shape = 's32[1]{0}', space=sflag, size = 0x4, scoped, tag = 'scoped memory for tpu_custom_call.1']
    #allocation7 [shape = 'u8[16384]{0}', space=vmem, size = 0x4000, scoped, tag = 'input window, operand 2, single buffered']
    #allocation8 [shape = 'u8[16384]{0}', space=vmem, size = 0x4000, scoped, tag = 'input window, operand 3, single buffered']
    #allocation9 [shape = 's32[1]{0}', space=sflag, size = 0x4, scoped, tag = 'scoped memory for tpu_custom_call.1']
    #allocation10 [shape = 'u8[512]{0}', space=smem, size = 0x200, scoped, tag = 'output window, operand 0, single buffered']
    %9 = vsyncpa [#allocation3], 0
    %10 = vsyncpa [#allocation6], 0
    %11 = vsyncpa [#allocation9], 0
    %12 = vsyncpa [#allocation4], 0
    // Predicated region
    $region2: #{tpu_custom_call.1} parent=1 // pred_check
      _
    $region3: #{tpu_custom_call.1} parent=1 // pred_check_branch
      %14 = sbr.rel (0) target = $region5
    $region4: #{tpu_custom_call.1} parent=1 // pred_region
      %16 = vsyncadd [#allocation3], 0
      %s17 = sshll.u32 %s0, 4
      %s18 = int_to_ptr.hbm [resolvable:$true] %s17
      %s19 = sshll.u32 [#allocation2], 4
      %s20 = int_to_ptr.vmem [resolvable:$true] %s19
      %25 = dma.hbm_to_vmem [thread:$0]  %s18, 384, %s20, [#allocation3], 128, 128, 8
    $region5: #{tpu_custom_call.1} parent=1 // pred_fallthru
      _
    // Predicated region
    $region6: #{tpu_custom_call.1} parent=1 // pred_check
      _
    $region7: #{tpu_custom_call.1} parent=1 // pred_check_branch
      %27 = sbr.rel (0) target = $region9
    $region8: #{tpu_custom_call.1} parent=1 // pred_region
      %29 = vsyncadd [#allocation6], 0
      %s30 = sshll.u32 %s1, 4
      %s31 = int_to_ptr.hbm [resolvable:$true] %s30
      %s32 = sshll.u32 [#allocation5], 4
      %s33 = int_to_ptr.vmem [resolvable:$true] %s32
      %38 = dma.hbm_to_vmem [thread:$0]  %s31, 384, %s33, [#allocation6], 128, 128, 8
    $region9: #{tpu_custom_call.1} parent=1 // pred_fallthru
      _
    // Predicated region
    $region10: #{tpu_custom_call.1} parent=1 // pred_check
      _
    $region11: #{tpu_custom_call.1} parent=1 // pred_check_branch
      %40 = sbr.rel (0) target = $region13
    $region12: #{tpu_custom_call.1} parent=1 // pred_region
      %42 = vsyncadd [#allocation6], 0
      %s43 = sshll.u32 %s2, 4
      %s44 = int_to_ptr.hbm [resolvable:$true] %s43
      %s45 = sshll.u32 [#allocation7], 4
      %s46 = int_to_ptr.vmem [resolvable:$true] %s45
      %51 = dma.hbm_to_vmem [thread:$0]  %s44, 512, %s46, [#allocation6], 128, 128, 8
    $region13: #{tpu_custom_call.1} parent=1 // pred_fallthru
      _
    // Predicated region
    $region14: #{tpu_custom_call.1} parent=1 // pred_check
      _
    $region15: #{tpu_custom_call.1} parent=1 // pred_check_branch
      %53 = sbr.rel (0) target = $region17
    $region16: #{tpu_custom_call.1} parent=1 // pred_region
      %55 = vsyncadd [#allocation9], 0
      %s56 = sshll.u32 %s3, 4
      %s57 = int_to_ptr.hbm [resolvable:$true] %s56
      %s58 = sshll.u32 [#allocation8], 4
      %s59 = int_to_ptr.vmem [resolvable:$true] %s58
      %64 = dma.hbm_to_vmem [thread:$0]  %s57, 512, %s59, [#allocation9], 128, 128, 8
    $region17: #{tpu_custom_call.1} parent=1 // pred_fallthru
      _
    // Predicated region
    $region18: #{tpu_custom_call.1} parent=1 // pred_check
      _
    $region19: #{tpu_custom_call.1} parent=1 // pred_check_branch
      %66 = sbr.rel (0) target = $region21
    $region20: #{tpu_custom_call.1} parent=1 // pred_region
      %68 = dma.done [#allocation3], 384
    $region21: #{tpu_custom_call.1} parent=1 // pred_fallthru
      _
    // Predicated region
    $region22: #{tpu_custom_call.1} parent=1 // pred_check
      _
    $region23: #{tpu_custom_call.1} parent=1 // pred_check_branch
      %70 = sbr.rel (0) target = $region25
    $region24: #{tpu_custom_call.1} parent=1 // pred_region
      %72 = dma.done [#allocation6], 384
    $region25: #{tpu_custom_call.1} parent=1 // pred_fallthru
      _
    // Predicated region
    $region26: #{tpu_custom_call.1} parent=1 // pred_check
      _
    $region27: #{tpu_custom_call.1} parent=1 // pred_check_branch
      %74 = sbr.rel (0) target = $region29
    $region28: #{tpu_custom_call.1} parent=1 // pred_region
      %76 = dma.done [#allocation6], 512
    $region29: #{tpu_custom_call.1} parent=1 // pred_fallthru
      _
    // Predicated region
    $region30: #{tpu_custom_call.1} parent=1 // pred_check
      _
    $region31: #{tpu_custom_call.1} parent=1 // pred_check_branch
      %78 = sbr.rel (0) target = $region33
    $region32: #{tpu_custom_call.1} parent=1 // pred_region
      %80 = dma.done [#allocation9], 512
    $region33: #{tpu_custom_call.1} parent=1 // pred_fallthru
      _
    %v82 = vld [vmem:[#allocation2] sm:$0xff]
    %v83 = vld [vmem:[#allocation2 + $0x8] sm:$0xff]
    %v84 = vld [vmem:[#allocation2 + $0x10] sm:$0xf]
    %v85 = vld [vmem:[#allocation5] sm:$0xff]
    %v86 = vld [vmem:[#allocation5 + $0x8] sm:$0xff]
    %v87 = vld [vmem:[#allocation5 + $0x10] sm:$0xf]
    %v88 = vlaneseq
    %v89 = vshrl.u32 %v88, 7
    %v90 = vadd.s32 %v89, 8
    %v91 = vadd.s32 %v89, 16
    %vm92 = vcmp.lt.s32.totalorder %v89, 18
    %vm93 = vcmp.lt.s32.totalorder %v90, 18
    %vm94 = vcmp.lt.s32.totalorder %v91, 18
    %vm95 = vcmp.ge.s32.totalorder %v89, 2
    %vm96 = vcmp.ge.s32.totalorder %v90, 2
    %vm97 = vcmp.ge.s32.totalorder %v91, 2
    %vm98 = vmand %vm95, %vm92
    %vm99 = vmand %vm96, %vm93
    %vm100 = vmand %vm97, %vm94
    %v101 = vsub.f32 %v85, %v82
    %v102 = vsub.f32 %v86, %v83
    %v103 = vsub.f32 %v87, %v84
    %v104 = vsel %vm98, 1, 0
    %v105 = vsel %vm99, 1, 0
    %v106 = vsel %vm100, 1, 0
    %vm107 = vcmp.eq.s32.totalorder %v104, 1
    %vm108 = vcmp.eq.s32.totalorder %v105, 1
    %vm109 = vcmp.eq.s32.totalorder %v106, 1
    %v110 = vsel %vm107, %v101, 0.0
    %v111 = vsel %vm108, %v102, 0.0
    %v112 = vsel %vm109, %v103, 0.0
    %v113 = vmul.f32 %v110, %v110
    %v114 = vmul.f32 %v111, %v111
    %v115 = vmul.f32 %v112, %v112
    %vm116 = vcmask 261120
    %v117 = vsel %vm116, %v113, 0.0
    %v118 = vsel %vm116, %v114, 0.0
    %v119 = vadd.f32 %v117, %v118
    %vm120 = vcmask 257024
    %v121 = vsel %vm120, %v115, 0.0
    %v122 = vadd.f32 %v119, %v121
    %123 = vadd.xlane.f32.xlu0 %v122
    %v124 = vpop.xlane.xlu0 %123
    %v125 = vrot.slane %v124, 4
    %v126 = vadd.f32 %v124, %v125
    %v127 = vrot.slane %v126, 2
    %v128 = vadd.f32 %v126, %v127
    %v129 = vrot.slane %v128, 1
    %v130 = vadd.f32 %v128, %v129
    %s131 = vtos %v130
    %v132 = vpack.c.bf16 %v82, %v82
    %v133 = vpack.c.bf16 %v83, %v83
    %v134 = vpack.c.bf16 %v84, %v84
    %v138 = vunpack.c.l.b16 %v132
    %v139 = vunpack.c.l.b16 %v133
    %v140 = vunpack.c.l.b16 %v134
    %v141 = vpack.c.b16 %v139, %v138
    %v142 = vpack.c.b16 %v140, %v140
    %vm143 = vcmask 1046528
    %v144 = vrot.slane %v141, 1
    %v145 = vrot.slane %v142, 1
    %v146 = vsel %vm143, %v144, %v145
    %v147 = vpack.c.b16 %v138, %v138
    %v148 = vrot.slane %v147, 7
    %vm149 = vcmask 1040384
    %v152 = vsel %vm149, %v145, %v148
    %v153 = vld [vmem:[#allocation7] sm:$0xff]
    %v154 = vld [vmem:[#allocation7 + $0x8] sm:$0xff]
    %v155 = vld [vmem:[#allocation7 + $0x10] sm:$0xff]
    %v156 = vld [vmem:[#allocation7 + $0x18] sm:$0xff]
    %v157 = vld [vmem:[#allocation8] sm:$0xff]
    %v158 = vld [vmem:[#allocation8 + $0x8] sm:$0xff]
    %v159 = vld [vmem:[#allocation8 + $0x10] sm:$0xff]
    %v160 = vld [vmem:[#allocation8 + $0x18] sm:$0xff]
    %v165 = vunpack.c.l.b16 %v157
    %v166 = vunpack.c.h.b16 %v157
    %v167 = vunpack.c.l.b16 %v158
    %v168 = vunpack.c.h.b16 %v158
    %v169 = vunpack.c.l.b16 %v159
    %v170 = vunpack.c.h.b16 %v159
    %v171 = vunpack.c.l.b16 %v160
    %v172 = vunpack.c.h.b16 %v160
    %v173 = vpack.c.b16 %v167, %v165
    %v174 = vpack.c.b16 %v168, %v166
    %v175 = vpack.c.b16 %v171, %v169
    %v176 = vpack.c.b16 %v172, %v170
    %v182 = vsel %vm116, %v146, 0
    %v184 = vsel %vm116, %v152, 0
    %186 = vmatpush.bf16.msra.mxu0 0
    %187 = vmatpush.bf16.msra.mxu0 0
    %188 = vmatpush.bf16.msra.mxu0 0
    %189 = vmatpush.bf16.msra.mxu0 0
    %190 = vmatpush.bf16.msra.mxu0 0
    %191 = vmatpush.bf16.msra.mxu0 0
    %192 = vmatpush.bf16.msra.mxu0 %v175
    %193 = vmatpush.bf16.msra.mxu0 %v173
    %194 = vmatmul.bf16.gmra.mxu0 %v182
    %v195 = vpop.f32.mrf.mxu0
    %v196 = vadd.f32 0.0, %v195
    %v197 = vpop.f32.mrf.mxu0
    %v198 = vadd.f32 0.0, %v197
    %199 = vmatmul.bf16.gmra.mxu0 %v184
    %v200 = vpop.f32.mrf.mxu0
    %v201 = vadd.f32 0.0, %v200
    %v202 = vpop.f32.mrf.mxu0
    %203 = vdwg.mxu0
    %204 = vmatpush.bf16.msra.mxu0 0
    %205 = vmatpush.bf16.msra.mxu0 0
    %206 = vmatpush.bf16.msra.mxu0 0
    %207 = vmatpush.bf16.msra.mxu0 0
    %208 = vmatpush.bf16.msra.mxu0 0
    %209 = vmatpush.bf16.msra.mxu0 0
    %210 = vmatpush.bf16.msra.mxu0 %v176
    %211 = vmatpush.bf16.msra.mxu0 %v174
    %212 = vmatmul.bf16.gmra.mxu0 %v182
    %v213 = vpop.f32.mrf.mxu0
    %v214 = vadd.f32 0.0, %v213
    %v215 = vpop.f32.mrf.mxu0
    %v216 = vadd.f32 0.0, %v215
    %217 = vmatmul.bf16.gmra.mxu0 %v184
    %v218 = vpop.f32.mrf.mxu0
    %v219 = vadd.f32 0.0, %v218
    %v220 = vpop.f32.mrf.mxu0
    %221 = vdwg.mxu0
    %v226 = vunpack.c.l.b16 %v153
    %v227 = vunpack.c.h.b16 %v153
    %v228 = vunpack.c.l.b16 %v154
    %v229 = vunpack.c.h.b16 %v154
    %v230 = vunpack.c.l.b16 %v155
    %v231 = vunpack.c.h.b16 %v155
    %v232 = vunpack.c.l.b16 %v156
    %v233 = vunpack.c.h.b16 %v156
    %v234 = vpack.c.b16 %v228, %v226
    %v235 = vpack.c.b16 %v229, %v227
    %v236 = vpack.c.b16 %v232, %v230
    %v237 = vpack.c.b16 %v233, %v231
    %v243 = vsel %vm116, %v141, 0
    %v246 = vsel %vm116, %v142, 0
    %248 = vmatpush.bf16.msra.mxu0 0
    %249 = vmatpush.bf16.msra.mxu0 0
    %250 = vmatpush.bf16.msra.mxu0 0
    %251 = vmatpush.bf16.msra.mxu0 0
    %252 = vmatpush.bf16.msra.mxu0 0
    %253 = vmatpush.bf16.msra.mxu0 0
    %254 = vmatpush.bf16.msra.mxu0 %v236
    %255 = vmatpush.bf16.msra.mxu0 %v234
    %256 = vmatmul.bf16.gmra.mxu0 %v243
    %v257 = vpop.f32.mrf.mxu0
    %v258 = vadd.f32 %v196, %v257
    %v259 = vpop.f32.mrf.mxu0
    %v260 = vadd.f32 %v198, %v259
    %261 = vmatmul.bf16.gmra.mxu0 %v246
    %v262 = vpop.f32.mrf.mxu0
    %v263 = vadd.f32 %v201, %v262
    %v264 = vpop.f32.mrf.mxu0
    %265 = vdwg.mxu0
    %266 = vmatpush.bf16.msra.mxu0 0
    %267 = vmatpush.bf16.msra.mxu0 0
    %268 = vmatpush.bf16.msra.mxu0 0
    %269 = vmatpush.bf16.msra.mxu0 0
    %270 = vmatpush.bf16.msra.mxu0 0
    %271 = vmatpush.bf16.msra.mxu0 0
    %272 = vmatpush.bf16.msra.mxu0 %v237
    %273 = vmatpush.bf16.msra.mxu0 %v235
    %274 = vmatmul.bf16.gmra.mxu0 %v243
    %v275 = vpop.f32.mrf.mxu0
    %v276 = vadd.f32 %v214, %v275
    %v277 = vpop.f32.mrf.mxu0
    %v278 = vadd.f32 %v216, %v277
    %279 = vmatmul.bf16.gmra.mxu0 %v246
    %v280 = vpop.f32.mrf.mxu0
    %v281 = vadd.f32 %v219, %v280
    %v282 = vpop.f32.mrf.mxu0
    %283 = vdwg.mxu0
    %v284 = vmul.f32 %v258, %v258
    %v285 = vmul.f32 %v260, %v260
    %v286 = vmul.f32 %v263, %v263
    %v287 = vmul.f32 %v276, %v276
    %v288 = vmul.f32 %v278, %v278
    %v289 = vmul.f32 %v281, %v281
    %v290 = vadd.f32 %v284, %v287
    %v291 = vadd.f32 %v285, %v288
    %v292 = vadd.f32 %v286, %v289
    %v293 = vpack.c.bf16 %v85, %v85
    %v294 = vpack.c.bf16 %v86, %v86
    %v295 = vpack.c.bf16 %v87, %v87
    %v299 = vunpack.c.l.b16 %v293
    %v300 = vunpack.c.l.b16 %v294
    %v301 = vunpack.c.l.b16 %v295
    %v302 = vpack.c.b16 %v300, %v299
    %v303 = vpack.c.b16 %v301, %v301
    %v304 = vrot.slane %v302, 1
    %v305 = vrot.slane %v303, 1
    %v306 = vsel %vm143, %v304, %v305
    %v307 = vpack.c.b16 %v299, %v299
    %v308 = vrot.slane %v307, 7
    %v311 = vsel %vm149, %v305, %v308
    %v313 = vsel %vm116, %v306, 0
    %v315 = vsel %vm116, %v311, 0
    %317 = vmatpush.bf16.msra.mxu0 0
    %318 = vmatpush.bf16.msra.mxu0 0
    %319 = vmatpush.bf16.msra.mxu0 0
    %320 = vmatpush.bf16.msra.mxu0 0
    %321 = vmatpush.bf16.msra.mxu0 0
    %322 = vmatpush.bf16.msra.mxu0 0
    %323 = vmatpush.bf16.msra.mxu0 %v175
    %324 = vmatpush.bf16.msra.mxu0 %v173
    %325 = vmatmul.bf16.gmra.mxu0 %v313
    %v326 = vpop.f32.mrf.mxu0
    %v327 = vadd.f32 0.0, %v326
    %v328 = vpop.f32.mrf.mxu0
    %v329 = vadd.f32 0.0, %v328
    %330 = vmatmul.bf16.gmra.mxu0 %v315
    %v331 = vpop.f32.mrf.mxu0
    %v332 = vadd.f32 0.0, %v331
    %v333 = vpop.f32.mrf.mxu0
    %334 = vdwg.mxu0
    %335 = vmatpush.bf16.msra.mxu0 0
    %336 = vmatpush.bf16.msra.mxu0 0
    %337 = vmatpush.bf16.msra.mxu0 0
    %338 = vmatpush.bf16.msra.mxu0 0
    %339 = vmatpush.bf16.msra.mxu0 0
    %340 = vmatpush.bf16.msra.mxu0 0
    %341 = vmatpush.bf16.msra.mxu0 %v176
    %342 = vmatpush.bf16.msra.mxu0 %v174
    %343 = vmatmul.bf16.gmra.mxu0 %v313
    %v344 = vpop.f32.mrf.mxu0
    %v345 = vadd.f32 0.0, %v344
    %v346 = vpop.f32.mrf.mxu0
    %v347 = vadd.f32 0.0, %v346
    %348 = vmatmul.bf16.gmra.mxu0 %v315
    %v349 = vpop.f32.mrf.mxu0
    %v350 = vadd.f32 0.0, %v349
    %v351 = vpop.f32.mrf.mxu0
    %352 = vdwg.mxu0
    %v354 = vsel %vm116, %v302, 0
    %v357 = vsel %vm116, %v303, 0
    %359 = vmatpush.bf16.msra.mxu0 0
    %360 = vmatpush.bf16.msra.mxu0 0
    %361 = vmatpush.bf16.msra.mxu0 0
    %362 = vmatpush.bf16.msra.mxu0 0
    %363 = vmatpush.bf16.msra.mxu0 0
    %364 = vmatpush.bf16.msra.mxu0 0
    %365 = vmatpush.bf16.msra.mxu0 %v236
    %366 = vmatpush.bf16.msra.mxu0 %v234
    %367 = vmatmul.bf16.gmra.mxu0 %v354
    %v368 = vpop.f32.mrf.mxu0
    %v369 = vadd.f32 %v327, %v368
    %v370 = vpop.f32.mrf.mxu0
    %v371 = vadd.f32 %v329, %v370
    %372 = vmatmul.bf16.gmra.mxu0 %v357
    %v373 = vpop.f32.mrf.mxu0
    %v374 = vadd.f32 %v332, %v373
    %v375 = vpop.f32.mrf.mxu0
    %376 = vdwg.mxu0
    %377 = vmatpush.bf16.msra.mxu0 0
    %378 = vmatpush.bf16.msra.mxu0 0
    %379 = vmatpush.bf16.msra.mxu0 0
    %380 = vmatpush.bf16.msra.mxu0 0
    %381 = vmatpush.bf16.msra.mxu0 0
    %382 = vmatpush.bf16.msra.mxu0 0
    %383 = vmatpush.bf16.msra.mxu0 %v237
    %384 = vmatpush.bf16.msra.mxu0 %v235
    %385 = vmatmul.bf16.gmra.mxu0 %v354
    %v386 = vpop.f32.mrf.mxu0
    %v387 = vadd.f32 %v345, %v386
    %v388 = vpop.f32.mrf.mxu0
    %v389 = vadd.f32 %v347, %v388
    %390 = vmatmul.bf16.gmra.mxu0 %v357
    %v391 = vpop.f32.mrf.mxu0
    %v392 = vadd.f32 %v350, %v391
    %v393 = vpop.f32.mrf.mxu0
    %394 = vdwg.mxu0
    %v395 = vmul.f32 %v369, %v369
    %v396 = vmul.f32 %v371, %v371
    %v397 = vmul.f32 %v374, %v374
    %v398 = vmul.f32 %v387, %v387
    %v399 = vmul.f32 %v389, %v389
    %v400 = vmul.f32 %v392, %v392
    %v401 = vadd.f32 %v395, %v398
    %v402 = vadd.f32 %v396, %v399
    %v403 = vadd.f32 %v397, %v400
    %v404 = vsub.f32 %v290, %v401
    %v405 = vsub.f32 %v291, %v402
    %v406 = vsub.f32 %v292, %v403
    %v407 = vsel %vm92, 1, 0
    %v408 = vsel %vm93, 1, 0
    %v409 = vsel %vm94, 1, 0
    %vm410 = vcmp.eq.s32.totalorder %v407, 1
    %vm411 = vcmp.eq.s32.totalorder %v408, 1
    %vm412 = vcmp.eq.s32.totalorder %v409, 1
    %v413 = vsel %vm410, %v404, 0.0
    %v414 = vsel %vm411, %v405, 0.0
    %v415 = vsel %vm412, %v406, 0.0
    %v416 = vand.u32 2147483647, %v413
    %v417 = vand.u32 2147483647, %v414
    %v418 = vand.u32 2147483647, %v415
    %vm419 = vcmp.lt.f32.partialorder %v416, 1.0
    %vm420 = vcmp.lt.f32.partialorder %v417, 1.0
    %vm421 = vcmp.lt.f32.partialorder %v418, 1.0
    %v422 = vmul.f32 %v413, 0.5
    %v423 = vmul.f32 %v414, 0.5
    %v424 = vmul.f32 %v415, 0.5
    %v425 = vmul.f32 %v422, %v413
    %v426 = vmul.f32 %v423, %v414
    %v427 = vmul.f32 %v424, %v415
    %v428 = vsub.f32 %v416, 0.5
    %v429 = vsub.f32 %v417, 0.5
    %v430 = vsub.f32 %v418, 0.5
    %v431 = vsel %vm419, %v425, %v428
    %v432 = vsel %vm420, %v426, %v429
    %v433 = vsel %vm421, %v427, %v430
    %v434 = vadd.f32 %v431, %v432
    %vm435 = vcmask 1043456
    %v436 = vsel %vm435, %v433, 0.0
    %v437 = vadd.f32 %v434, %v436
    %438 = vadd.xlane.f32.xlu0 %v437
    %v439 = vpop.xlane.xlu0 %438
    %v440 = vrot.slane %v439, 4
    %v441 = vadd.f32 %v439, %v440
    %v442 = vrot.slane %v441, 2
    %v443 = vadd.f32 %v441, %v442
    %v444 = vrot.slane %v443, 1
    %v445 = vadd.f32 %v443, %v444
    %s446 = vtos %v445
    %s447 = smul.f32 %s446, 1.6835017e-08
    %s448 = smul.f32 %s131, 0.001953125
    %s449 = sadd.f32 %s447, %s448
    %s450 = scalar_lea.smem [#allocation10], 0
    %451 = sst [smem:[%s450]] %s449
    // Predicated region
    $region34: #{tpu_custom_call.1} parent=1 // pred_check
      _
    $region35: #{tpu_custom_call.1} parent=1 // pred_check_branch
      %453 = sbr.rel (0) target = $region37
    $region36: #{tpu_custom_call.1} parent=1 // pred_region
      %455 = vsyncadd [#allocation4], 0
      %s457 = sshll.u32 %s4, 4
      %s458 = int_to_ptr.hbm [resolvable:$true] %s457
      %460 = dma.smem_to_hbm [#allocation10], 16, %s458, [#allocation4]
    $region37: #{tpu_custom_call.1} parent=1 // pred_fallthru
      _
    // Predicated region
    $region38: #{tpu_custom_call.1} parent=1 // pred_check
      _
    $region39: #{tpu_custom_call.1} parent=1 // pred_check_branch
      %462 = sbr.rel (0) target = $region41
    $region40: #{tpu_custom_call.1} parent=1 // pred_region
      %464 = dma.done [#allocation4], 16
    $region41: #{tpu_custom_call.1} parent=1 // pred_fallthru
      _
    %465 = sfence
    %466 = vsyncpa [#allocation3], 1
    %467 = vsyncpa [#allocation6], 1
    %468 = vsyncpa [#allocation9], 1
    %469 = vsyncpa [#allocation4], 1

</llo_original>
